<compile_context>
chip_gen: v6e
topology: v6e:2x2x1
jax: 0.10.0
libtpu: 0.0.40
codegen_flags: <defaults>
</compile_context>

<pallas_src>
import functools

import jax
import jax.numpy as jnp
from jax.experimental import pallas as pl
from jax.experimental.pallas import tpu as pltpu


def mlp_kernel(x_ref, w0_ref, b0_ref, wh_ref, bh_ref, wo_ref, bo_ref, o_ref,
               *, num_hidden):
    """One batch-tile of the MLP, fully fused.

    x_ref : (TB, D_in)
    w0_ref: (D_in, H)      first Linear weight
    b0_ref: (1, H)         first Linear bias
    wh_ref: (max(L,1),H,H) stacked hidden Linear weights (dummy if L == 0)
    bh_ref: (max(L,1),1,H) stacked hidden Linear biases
    wo_ref: (1, H)         output Linear weight (as a row)
    bo_ref: (1, 1)         output Linear bias
    o_ref : (TB, 1)
    num_hidden : static python int = hidden_num - 1
    """
    w_dtype = w0_ref.dtype

    # fc + ReLU (activation lives in vregs; f32 accumulation)
    h = jnp.dot(x_ref[...].astype(w_dtype), w0_ref[...],
                preferred_element_type=jnp.float32)
    h = jnp.maximum(h + b0_ref[...].astype(jnp.float32), 0.0)

    # (Linear -> ReLU) * num_hidden — static Python loop == full unroll,
    # so the LLO scheduler sees every matmul and there is no loop overhead.
    for i in range(num_hidden):
        h = jnp.dot(h.astype(w_dtype), wh_ref[i],
                    preferred_element_type=jnp.float32)
        h = jnp.maximum(h + bh_ref[i].astype(jnp.float32), 0.0)

    # Output layer (H -> 1): an N=1 MXU matmul would use 1/256 of the MXU
    # columns; a VPU multiply + lane reduction is strictly cheaper here.
    out = jnp.sum(h * wo_ref[...].astype(jnp.float32), axis=-1, keepdims=True)
    o_ref[...] = out + bo_ref[...].astype(jnp.float32)


def price_prediction_feedforward(x, params, hidden_num, *, block_b=256,
                                 use_bf16_weights=False):
    """Runs the whole MLP in one pallas_call, batch-tiled over a parallel grid.

    # NOTE: for very large hidden stacks (L*H*H*bytes approaching the v7x
    # 64 MiB VMEM) the wh stack should be streamed one layer at a time
    # (grid axis over L / manual double-buffered DMA) instead of held resident.
    """
    w0, b0, wh, bh, wo_row, bo = params
    B, D_in = x.shape
    H = w0.shape[1]
    L = hidden_num - 1  # true number of (Linear, ReLU) hidden pairs

    if use_bf16_weights:
        # bf16 weights hit MXU peak on v6e/v7x and halve weight VMEM traffic;
        # accumulation stays f32 inside the kernel.
        w0, wh, wo_row = (w.astype(jnp.bfloat16) for w in (w0, wh, wo_row))

    block_b = min(block_b, B)
    grid = (pl.cdiv(B, block_b),)

    # VMEM budget: resident params + double-buffered x/out tiles, with headroom.
    param_bytes = sum(int(p.nbytes) for p in (w0, b0, wh, bh, wo_row, bo))
    act_bytes = 2 * (block_b * D_in * x.dtype.itemsize + block_b * 4)
    vmem_limit = int(min(max(2 * (param_bytes + act_bytes), 32 << 20), 64 << 20))

    kernel = functools.partial(mlp_kernel, num_hidden=L)

    return pl.pallas_call(
        kernel,
        out_shape=jax.ShapeDtypeStruct((B, 1), jnp.float32),
        grid=grid,
        in_specs=[
            pl.BlockSpec((block_b, D_in), lambda i: (i, 0)),       # x (tiled)
            pl.BlockSpec(w0.shape, lambda i: (0, 0)),              # resident
            pl.BlockSpec(b0.shape, lambda i: (0, 0)),
            pl.BlockSpec(wh.shape, lambda i: (0, 0, 0)),
            pl.BlockSpec(bh.shape, lambda i: (0, 0, 0)),
            pl.BlockSpec(wo_row.shape, lambda i: (0, 0)),
            pl.BlockSpec(bo.shape, lambda i: (0, 0)),
        ],
        out_specs=pl.BlockSpec((block_b, 1), lambda i: (i, 0)),
        compiler_params=pltpu.CompilerParams(
            dimension_semantics=("parallel",),   # shards batch tiles across v7x's 2 TCs
            vmem_limit_bytes=vmem_limit,
        ),
    )(x, w0, b0, wh, bh, wo_row, bo)


def init_params(key, input_dim, hidden_dim, hidden_num):
    """Deterministic init mimicking torch.nn.Linear's U(-1/sqrt(fan_in), ..)."""
    keys = jax.random.split(key, 6)

    def uni(k, shape, fan_in):
        bound = 1.0 / jnp.sqrt(jnp.float32(fan_in))
        return jax.random.uniform(k, shape, jnp.float32, -bound, bound)

    L = hidden_num - 1
    w0 = uni(keys[0], (input_dim, hidden_dim), input_dim)
    b0 = uni(keys[1], (1, hidden_dim), input_dim)
    if L > 0:
        wh = uni(keys[2], (L, hidden_dim, hidden_dim), hidden_dim)
        bh = uni(keys[3], (L, 1, hidden_dim), hidden_dim)
    else:
        # Dummy placeholders (never read: the kernel unrolls `hidden_num - 1`
        # layers, which is 0 here — this fixes the old hidden_num==1 bug).
        wh = jnp.zeros((1, hidden_dim, hidden_dim), jnp.float32)
        bh = jnp.zeros((1, 1, hidden_dim), jnp.float32)
    wo_row = uni(keys[4], (1, hidden_dim), hidden_dim)
    bo = uni(keys[5], (1, 1), hidden_dim)
    return (w0, b0, wh, bh, wo_row, bo)


def reference_forward(x, params, hidden_num):
    w0, b0, wh, bh, wo_row, bo = params
    h = jnp.maximum(x @ w0 + b0, 0.0)
    for i in range(hidden_num - 1):
        h = jnp.maximum(h @ wh[i] + bh[i], 0.0)
    return h @ wo_row.T + bo


if __name__ == "__main__":
    batch = 8
    input_dim = 16
    hidden_dim = 32
    hidden_num = 3  # fc + 2 hidden linears + out_layer

    key = jax.random.PRNGKey(0)
    kx, kp = jax.random.split(key)
    x = jax.random.normal(kx, (batch, input_dim), jnp.float32)

    # Case 1: hidden_num = 3
    params = init_params(kp, input_dim, hidden_dim, hidden_num)
    out = jax.block_until_ready(
        price_prediction_feedforward(x, params, hidden_num))
    ref = reference_forward(x, params, hidden_num)
    assert out.shape == (batch, 1), out.shape
    assert jnp.allclose(out, ref, atol=1e-5, rtol=1e-5), (out, ref)

    # Case 2: hidden_num = 1 (previously buggy path: no hidden layers at all)
    params1 = init_params(kp, input_dim, hidden_dim, 1)
    out1 = jax.block_until_ready(
        price_prediction_feedforward(x, params1, 1))
    ref1 = reference_forward(x, params1, 1)
    assert out1.shape == (batch, 1), out1.shape
    assert jnp.allclose(out1, ref1, atol=1e-5, rtol=1e-5), (out1, ref1)

    print("KERNEL_OK")
</pallas_src>

<mosaic_0001>
module attributes {stable_mosaic.version = 11 : i64} {
  func.func @mlp_kernel(%arg0: i32, %arg1: memref<8x16xf32, #tpu.memory_space<vmem>>, %arg2: memref<16x32xf32, #tpu.memory_space<vmem>>, %arg3: memref<1x32xf32, #tpu.memory_space<vmem>>, %arg4: memref<2x32x32xf32, #tpu.memory_space<vmem>>, %arg5: memref<2x1x32xf32, #tpu.memory_space<vmem>>, %arg6: memref<1x32xf32, #tpu.memory_space<vmem>>, %arg7: memref<1x1xf32, #tpu.memory_space<vmem>>, %arg8: memref<8x1xf32, #tpu.memory_space<vmem>>) attributes {dimension_semantics = [#tpu.dimension_semantics<parallel>], iteration_bounds = array<i64: 1>, scalar_prefetch = 0 : i64, scratch_operands = 0 : i64, tpu.core_type = #tpu.core_type<tc>, window_params = [{transform_indices = @transform_0, window_bounds = array<i64: 8, 16>}, {pipeline_mode = #tpu.pipeline_mode<synchronous>, transform_indices = @transform_1, window_bounds = array<i64: 16, 32>}, {pipeline_mode = #tpu.pipeline_mode<synchronous>, transform_indices = @transform_2, window_bounds = array<i64: 1, 32>}, {pipeline_mode = #tpu.pipeline_mode<synchronous>, transform_indices = @transform_3, window_bounds = array<i64: 2, 32, 32>}, {pipeline_mode = #tpu.pipeline_mode<synchronous>, transform_indices = @transform_4, window_bounds = array<i64: 2, 1, 32>}, {pipeline_mode = #tpu.pipeline_mode<synchronous>, transform_indices = @transform_5, window_bounds = array<i64: 1, 32>}, {pipeline_mode = #tpu.pipeline_mode<synchronous>, transform_indices = @transform_6, window_bounds = array<i64: 1, 1>}, {transform_indices = @transform_7, window_bounds = array<i64: 8, 1>}]} {
    %c0 = arith.constant 0 : index
    %c0_0 = arith.constant 0 : index
    %0 = vector.load %arg1[%c0, %c0_0] : memref<8x16xf32, #tpu.memory_space<vmem>>, vector<8x16xf32>
    %c0_1 = arith.constant 0 : index
    %c0_2 = arith.constant 0 : index
    %1 = vector.load %arg2[%c0_1, %c0_2] : memref<16x32xf32, #tpu.memory_space<vmem>>, vector<16x32xf32>
    %cst = arith.constant dense<0.000000e+00> : vector<8x32xf32>
    %2 = tpu.matmul %0, %1, %cst {dimension_numbers = #tpu.dot_dimension_numbers<[1], [0], [0], [1], [0, 0, 1, 1], [], []>} : vector<8x16xf32>, vector<16x32xf32>, vector<8x32xf32> -> vector<8x32xf32>
    %c0_3 = arith.constant 0 : index
    %c0_4 = arith.constant 0 : index
    %3 = vector.load %arg3[%c0_3, %c0_4] : memref<1x32xf32, #tpu.memory_space<vmem>>, vector<1x32xf32>
    %4 = vector.broadcast %3 : vector<1x32xf32> to vector<8x32xf32>
    %5 = arith.addf %2, %4 : vector<8x32xf32>
    %cst_5 = arith.constant 0.000000e+00 : f32
    %6 = vector.broadcast %cst_5 : f32 to vector<8x32xf32>
    %7 = arith.maximumf %5, %6 : vector<8x32xf32>
    %c0_6 = arith.constant 0 : index
    %c0_7 = arith.constant 0 : index
    %c0_8 = arith.constant 0 : index
    %8 = vector.load %arg4[%c0_6, %c0_7, %c0_8] : memref<2x32x32xf32, #tpu.memory_space<vmem>>, vector<1x32x32xf32>
    %9 = vector.shape_cast %8 : vector<1x32x32xf32> to vector<32x32xf32>
    %cst_9 = arith.constant dense<0.000000e+00> : vector<8x32xf32>
    %10 = tpu.matmul %7, %9, %cst_9 {dimension_numbers = #tpu.dot_dimension_numbers<[1], [0], [0], [1], [0, 0, 1, 1], [], []>} : vector<8x32xf32>, vector<32x32xf32>, vector<8x32xf32> -> vector<8x32xf32>
    %c0_10 = arith.constant 0 : index
    %c0_11 = arith.constant 0 : index
    %c0_12 = arith.constant 0 : index
    %11 = vector.load %arg5[%c0_10, %c0_11, %c0_12] : memref<2x1x32xf32, #tpu.memory_space<vmem>>, vector<1x1x32xf32>
    %12 = vector.shape_cast %11 : vector<1x1x32xf32> to vector<1x32xf32>
    %13 = vector.broadcast %12 : vector<1x32xf32> to vector<8x32xf32>
    %14 = arith.addf %10, %13 : vector<8x32xf32>
    %cst_13 = arith.constant 0.000000e+00 : f32
    %15 = vector.broadcast %cst_13 : f32 to vector<8x32xf32>
    %16 = arith.maximumf %14, %15 : vector<8x32xf32>
    %c1 = arith.constant 1 : index
    %c0_14 = arith.constant 0 : index
    %c0_15 = arith.constant 0 : index
    %17 = vector.load %arg4[%c1, %c0_14, %c0_15] : memref<2x32x32xf32, #tpu.memory_space<vmem>>, vector<1x32x32xf32>
    %18 = vector.shape_cast %17 : vector<1x32x32xf32> to vector<32x32xf32>
    %cst_16 = arith.constant dense<0.000000e+00> : vector<8x32xf32>
    %19 = tpu.matmul %16, %18, %cst_16 {dimension_numbers = #tpu.dot_dimension_numbers<[1], [0], [0], [1], [0, 0, 1, 1], [], []>} : vector<8x32xf32>, vector<32x32xf32>, vector<8x32xf32> -> vector<8x32xf32>
    %c1_17 = arith.constant 1 : index
    %c0_18 = arith.constant 0 : index
    %c0_19 = arith.constant 0 : index
    %20 = vector.load %arg5[%c1_17, %c0_18, %c0_19] : memref<2x1x32xf32, #tpu.memory_space<vmem>>, vector<1x1x32xf32>
    %21 = vector.shape_cast %20 : vector<1x1x32xf32> to vector<1x32xf32>
    %22 = vector.broadcast %21 : vector<1x32xf32> to vector<8x32xf32>
    %23 = arith.addf %19, %22 : vector<8x32xf32>
    %cst_20 = arith.constant 0.000000e+00 : f32
    %24 = vector.broadcast %cst_20 : f32 to vector<8x32xf32>
    %25 = arith.maximumf %23, %24 : vector<8x32xf32>
    %c0_21 = arith.constant 0 : index
    %c0_22 = arith.constant 0 : index
    %26 = vector.load %arg6[%c0_21, %c0_22] : memref<1x32xf32, #tpu.memory_space<vmem>>, vector<1x32xf32>
    %27 = vector.broadcast %26 : vector<1x32xf32> to vector<8x32xf32>
    %28 = arith.mulf %25, %27 : vector<8x32xf32>
    %cst_23 = arith.constant dense<0.000000e+00> : vector<8xf32>
    %29 = vector.multi_reduction <add>, %28, %cst_23 [1] : vector<8x32xf32> to vector<8xf32>
    %30 = vector.shape_cast %29 : vector<8xf32> to vector<8x1xf32>
    %c0_24 = arith.constant 0 : index
    %c0_25 = arith.constant 0 : index
    %31 = vector.load %arg7[%c0_24, %c0_25] : memref<1x1xf32, #tpu.memory_space<vmem>>, vector<1x1xf32>
    %32 = vector.broadcast %31 : vector<1x1xf32> to vector<8x1xf32>
    %33 = arith.addf %30, %32 : vector<8x1xf32>
    %c0_26 = arith.constant 0 : index
    %c0_27 = arith.constant 0 : index
    %34 = vector.load %arg8[%c0_26, %c0_27] : memref<8x1xf32, #tpu.memory_space<vmem>>, vector<8x1xf32>
    tpu.vector_store %arg8[%c0_26, %c0_27], %33 {strides = array<i32>} : memref<8x1xf32, #tpu.memory_space<vmem>>, vector<8x1xf32>,
    return
  }
  func.func @transform_0(%arg0: i32) -> (i32, i32) {
    %c0_i32 = arith.constant 0 : i32
    %c0_i32_0 = arith.constant 0 : i32
    return %arg0, %c0_i32 : i32, i32
  }
  func.func @transform_1(%arg0: i32) -> (i32, i32) {
    %c0_i32 = arith.constant 0 : i32
    %c0_i32_0 = arith.constant 0 : i32
    %c0_i32_1 = arith.constant 0 : i32
    return %c0_i32, %c0_i32_0 : i32, i32
  }
  func.func @transform_2(%arg0: i32) -> (i32, i32) {
    %c0_i32 = arith.constant 0 : i32
    %c0_i32_0 = arith.constant 0 : i32
    %c0_i32_1 = arith.constant 0 : i32
    return %c0_i32, %c0_i32_0 : i32, i32
  }
  func.func @transform_3(%arg0: i32) -> (i32, i32, i32) {
    %c0_i32 = arith.constant 0 : i32
    %c0_i32_0 = arith.constant 0 : i32
    %c0_i32_1 = arith.constant 0 : i32
    %c0_i32_2 = arith.constant 0 : i32
    return %c0_i32, %c0_i32_0, %c0_i32_1 : i32, i32, i32
  }
  func.func @transform_4(%arg0: i32) -> (i32, i32, i32) {
    %c0_i32 = arith.constant 0 : i32
    %c0_i32_0 = arith.constant 0 : i32
    %c0_i32_1 = arith.constant 0 : i32
    %c0_i32_2 = arith.constant 0 : i32
    return %c0_i32, %c0_i32_0, %c0_i32_1 : i32, i32, i32
  }
  func.func @transform_5(%arg0: i32) -> (i32, i32) {
    %c0_i32 = arith.constant 0 : i32
    %c0_i32_0 = arith.constant 0 : i32
    %c0_i32_1 = arith.constant 0 : i32
    return %c0_i32, %c0_i32_0 : i32, i32
  }
  func.func @transform_6(%arg0: i32) -> (i32, i32) {
    %c0_i32 = arith.constant 0 : i32
    %c0_i32_0 = arith.constant 0 : i32
    %c0_i32_1 = arith.constant 0 : i32
    return %c0_i32, %c0_i32_0 : i32, i32
  }
  func.func @transform_7(%arg0: i32) -> (i32, i32) {
    %c0_i32 = arith.constant 0 : i32
    %c0_i32_0 = arith.constant 0 : i32
    return %arg0, %c0_i32 : i32, i32
  }
}

</mosaic_0001>

<llo_original>
// kernel: tpu_custom_call.1
$region0: #{tpu_custom_call.1}
  #allocation0 [shape = 'u32[]', space=smem, size = 0x4, offset = 0x4, fixed_abs, tag = 'smem constant byte address 0x4 - core index']
  #allocation1 [shape = 'u32[144,128]{1,0:T(1,128)}', space=vmem, size = 0x12000, scoped, tag = 'internal scratch']
  #allocation2 [shape = 'f32[1,1]{1,0:T(1,128)S(1)}', space=vmem, size = 0x200, scoped, tag = 'scoped memory for tpu_custom_call.1']
  %s0 = inlined_call_operand.hbm [shape: f32[8,16], index: 0, kind: input, shape index: {}]
  %s1 = inlined_call_operand.hbm [shape: f32[16,32], index: 1, kind: input, shape index: {}]
  %s2 = inlined_call_operand.vmem [shape: f32[1,32], index: 2, kind: input, shape index: {}]
  %s3 = inlined_call_operand.hbm [shape: f32[2,32,32], index: 3, kind: input, shape index: {}]
  %s4 = inlined_call_operand.vmem [shape: f32[2,1,32], index: 4, kind: input, shape index: {}]
  %s5 = inlined_call_operand.vmem [shape: f32[1,32], index: 5, kind: input, shape index: {}]
  %s6 = inlined_call_operand.<no memory space> [shape: f32[1,1], index: 6, kind: input, shape index: {}]
  %s7 = inlined_call_operand.vmem [shape: f32[8,1], index: 7, kind: output, shape index: {}]
  %s8 = sld [smem:[#allocation0]]
  $region50: #{tpu_custom_call.1} parent=0
    _
  %s10 = ssub.s32 1, %s8
  %s11 = scalar_select 0, %s10, %s8
  %v12 = vstv %s6
  %13 = vst [vmem:[#allocation2] sm:$0x1] %v12
  $region1: #{tpu_custom_call.1} parent=0
    #allocation3 [shape = 'u8[4096]{0}', space=vmem, size = 0x1000, scoped, tag = 'input window, operand 0, single buffered']
    #allocation4 [shape = 's32[1]{0}', space=sflag, size = 0x4, scoped, tag = 'scoped memory for tpu_custom_call.1']
    #allocation5 [shape = 'u8[8192]{0}', space=vmem, size = 0x2000, scoped, tag = 'input window, operand 1, single buffered']
    #allocation6 [shape = 's32[1]{0}', space=sflag, size = 0x4, scoped, tag = 'scoped memory for tpu_custom_call.1']
    #allocation7 [shape = 'u8[32768]{0}', space=vmem, size = 0x8000, scoped, tag = 'input window, operand 3, single buffered']
    %14 = vsyncpa [#allocation4], 0
    %15 = vsyncpa [#allocation6], 0
    // Predicated region
    $region2: #{tpu_custom_call.1} parent=1 // pred_check
      _
    $region3: #{tpu_custom_call.1} parent=1 // pred_check_branch
      %17 = sbr.rel (0) target = $region5
    $region4: #{tpu_custom_call.1} parent=1 // pred_region
      %s19 = ssub.s32 128, 128
      %20 = vsyncadd [#allocation4], %s19
      %s22 = sshll.u32 [#allocation3], 4
      %s23 = int_to_ptr.vmem [resolvable:$true] %s22
      %25 = dma.hbm_to_vmem [thread:$0]  %s0, 128, %s23, [#allocation4]
    $region5: #{tpu_custom_call.1} parent=1 // pred_fallthru
      _
    // Predicated region
    $region6: #{tpu_custom_call.1} parent=1 // pred_check
      _
    $region7: #{tpu_custom_call.1} parent=1 // pred_check_branch
      %27 = sbr.rel (0) target = $region9
    $region8: #{tpu_custom_call.1} parent=1 // pred_region
      %s29 = ssub.s32 256, 256
      %30 = vsyncadd [#allocation6], %s29
      %s31 = sshll.u32 [#allocation5], 4
      %s32 = int_to_ptr.vmem [resolvable:$true] %s31
      %37 = dma.hbm_to_vmem [thread:$0]  %s1, 256, %s32, [#allocation6], 128, 128, 8
    $region9: #{tpu_custom_call.1} parent=1 // pred_fallthru
      _
    // Predicated region
    $region10: #{tpu_custom_call.1} parent=1 // pred_check
      _
    $region11: #{tpu_custom_call.1} parent=1 // pred_check_branch
      %39 = sbr.rel (0) target = $region13
    $region12: #{tpu_custom_call.1} parent=1 // pred_region
      _
    $region13: #{tpu_custom_call.1} parent=1 // pred_fallthru
      _
    // Predicated region
    $region14: #{tpu_custom_call.1} parent=1 // pred_check
      _
    $region15: #{tpu_custom_call.1} parent=1 // pred_check_branch
      %41 = sbr.rel (0) target = $region17
    $region16: #{tpu_custom_call.1} parent=1 // pred_region
      %s43 = ssub.s32 1024, 1024
      %44 = vsyncadd [#allocation6], %s43
      %s45 = sshll.u32 [#allocation7], 4
      %s46 = int_to_ptr.vmem [resolvable:$true] %s45
      %51 = dma.hbm_to_vmem [thread:$0]  %s3, 1024, %s46, [#allocation6], 128, 128, 8
    $region17: #{tpu_custom_call.1} parent=1 // pred_fallthru
      _
    // Predicated region
    $region18: #{tpu_custom_call.1} parent=1 // pred_check
      _
    $region19: #{tpu_custom_call.1} parent=1 // pred_check_branch
      %53 = sbr.rel (0) target = $region21
    $region20: #{tpu_custom_call.1} parent=1 // pred_region
      _
    $region21: #{tpu_custom_call.1} parent=1 // pred_fallthru
      _
    // Predicated region
    $region22: #{tpu_custom_call.1} parent=1 // pred_check
      _
    $region23: #{tpu_custom_call.1} parent=1 // pred_check_branch
      %55 = sbr.rel (0) target = $region25
    $region24: #{tpu_custom_call.1} parent=1 // pred_region
      _
    $region25: #{tpu_custom_call.1} parent=1 // pred_fallthru
      _
    // Predicated region
    $region26: #{tpu_custom_call.1} parent=1 // pred_check
      _
    $region27: #{tpu_custom_call.1} parent=1 // pred_check_branch
      %57 = sbr.rel (0) target = $region29
    $region28: #{tpu_custom_call.1} parent=1 // pred_region
      _
    $region29: #{tpu_custom_call.1} parent=1 // pred_fallthru
      _
    // Predicated region
    $region30: #{tpu_custom_call.1} parent=1 // pred_check
      _
    $region31: #{tpu_custom_call.1} parent=1 // pred_check_branch
      %59 = sbr.rel (0) target = $region33
    $region32: #{tpu_custom_call.1} parent=1 // pred_region
      %60 = dma.done [#allocation4], 128
    $region33: #{tpu_custom_call.1} parent=1 // pred_fallthru
      _
    // Predicated region
    $region34: #{tpu_custom_call.1} parent=1 // pred_check
      _
    $region35: #{tpu_custom_call.1} parent=1 // pred_check_branch
      %62 = sbr.rel (0) target = $region37
    $region36: #{tpu_custom_call.1} parent=1 // pred_region
      %63 = dma.done [#allocation6], 256
    $region37: #{tpu_custom_call.1} parent=1 // pred_fallthru
      _
    // Predicated region
    $region38: #{tpu_custom_call.1} parent=1 // pred_check
      _
    $region39: #{tpu_custom_call.1} parent=1 // pred_check_branch
      %65 = sbr.rel (0) target = $region41
    $region40: #{tpu_custom_call.1} parent=1 // pred_region
      %66 = dma.done [#allocation6], 1024
    $region41: #{tpu_custom_call.1} parent=1 // pred_fallthru
      _
    %v67 = vld [vmem:[#allocation3] sm:$0xff]
    %v68 = vld [vmem:[#allocation5] sm:$0xff]
    %v69 = vld [vmem:[#allocation5 + $0x8] sm:$0xff]
    %v70 = vld [vmem:[%s2] sm:$0x1]
    %v72 = vlaneseq
    %v73 = vshrl.u32 %v72, 7
    %v74 = vsub.s32 0, %v73
    %v75 = vrot.slane %v70, %v74
    %vm77 = vcmask 130048
    %v79 = vsel %vm77, %v67, 0
    %81 = vmatprep.subr.mxu0 0.0
    %82 = vmatpush1.msra.mxu0 0.0
    %83 = vmatprep.subr.mxu0 0.0
    %84 = vmatpush1.msra.mxu0 0.0
    %85 = vmatprep.subr.mxu0 0.0
    %86 = vmatpush1.msra.mxu0 0.0
    %87 = vmatprep.subr.mxu0 0.0
    %88 = vmatpush1.msra.mxu0 0.0
    %89 = vmatprep.subr.mxu0 0.0
    %90 = vmatpush1.msra.mxu0 0.0
    %91 = vmatprep.subr.mxu0 0.0
    %92 = vmatpush1.msra.mxu0 0.0
    %93 = vmatprep.subr.mxu0 0.0
    %94 = vmatpush1.msra.mxu0 0.0
    %95 = vmatprep.subr.mxu0 0.0
    %96 = vmatpush1.msra.mxu0 0.0
    %97 = vmatprep.subr.mxu0 0.0
    %98 = vmatpush1.msra.mxu0 0.0
    %99 = vmatprep.subr.mxu0 0.0
    %100 = vmatpush1.msra.mxu0 0.0
    %101 = vmatprep.subr.mxu0 0.0
    %102 = vmatpush1.msra.mxu0 0.0
    %103 = vmatprep.subr.mxu0 0.0
    %104 = vmatpush1.msra.mxu0 0.0
    %105 = vmatprep.subr.mxu0 0.0
    %106 = vmatpush1.msra.mxu0 0.0
    %107 = vmatprep.subr.mxu0 0.0
    %108 = vmatpush1.msra.mxu0 0.0
    %109 = vmatprep.subr.mxu0 0.0
    %110 = vmatpush1.msra.mxu0 %v69
    %111 = vmatprep.subr.mxu0 0.0
    %112 = vmatpush1.msra.mxu0 %v68
    %113 = vmatprep.subr.mxu0 0.0
    %114 = vmatpush2.msra.mxu0 0.0
    %115 = vmatprep.subr.mxu0 0.0
    %116 = vmatpush2.msra.mxu0 0.0
    %117 = vmatprep.subr.mxu0 0.0
    %118 = vmatpush2.msra.mxu0 0.0
    %119 = vmatprep.subr.mxu0 0.0
    %120 = vmatpush2.msra.mxu0 0.0
    %121 = vmatprep.subr.mxu0 0.0
    %122 = vmatpush2.msra.mxu0 0.0
    %123 = vmatprep.subr.mxu0 0.0
    %124 = vmatpush2.msra.mxu0 0.0
    %125 = vmatprep.subr.mxu0 0.0
    %126 = vmatpush2.msra.mxu0 0.0
    %127 = vmatprep.subr.mxu0 0.0
    %128 = vmatpush2.msra.mxu0 0.0
    %129 = vmatprep.subr.mxu0 0.0
    %130 = vmatpush2.msra.mxu0 0.0
    %131 = vmatprep.subr.mxu0 0.0
    %132 = vmatpush2.msra.mxu0 0.0
    %133 = vmatprep.subr.mxu0 0.0
    %134 = vmatpush2.msra.mxu0 0.0
    %135 = vmatprep.subr.mxu0 0.0
    %136 = vmatpush2.msra.mxu0 0.0
    %137 = vmatprep.subr.mxu0 0.0
    %138 = vmatpush2.msra.mxu0 0.0
    %139 = vmatprep.subr.mxu0 0.0
    %140 = vmatpush2.msra.mxu0 0.0
    %141 = vmatprep.subr.mxu0 0.0
    %142 = vmatpush2.msra.mxu0 0.0
    %143 = vmatprep.subr.mxu0 0.0
    %144 = vmatpush2.msra.mxu0 0.0
    %145 = vmatprep.mubr.f32.mxu0 0.0
    %146 = vmatmul.mubr.f32.gmra.mxu0 %v79
    %v147 = vpop.f32.mrf.mxu0
    %v148 = vadd.f32 %v75, %v147
    %v149 = vpop.f32.mrf.mxu0
    %150 = vdwg.mxu0
    %v151 = vmax.f32 %v148, 0.0
    %v152 = vld [vmem:[#allocation7] sm:$0xff]
    %v153 = vld [vmem:[#allocation7 + $0x8] sm:$0xff]
    %v154 = vld [vmem:[#allocation7 + $0x10] sm:$0xff]
    %v155 = vld [vmem:[#allocation7 + $0x18] sm:$0xff]
    %v156 = vld [vmem:[%s4] sm:$0x1]
    %v158 = vlaneseq
    %v159 = vshrl.u32 %v158, 7
    %v160 = vsub.s32 0, %v159
    %v161 = vrot.slane %v156, %v160
    %vm163 = vcmask 261120
    %v165 = vsel %vm163, %v151, 0
    %167 = vmatprep.subr.mxu0 0.0
    %168 = vmatpush1.msra.mxu0 0.0
    %169 = vmatprep.subr.mxu0 0.0
    %170 = vmatpush1.msra.mxu0 0.0
    %171 = vmatprep.subr.mxu0 0.0
    %172 = vmatpush1.msra.mxu0 0.0
    %173 = vmatprep.subr.mxu0 0.0
    %174 = vmatpush1.msra.mxu0 0.0
    %175 = vmatprep.subr.mxu0 0.0
    %176 = vmatpush1.msra.mxu0 0.0
    %177 = vmatprep.subr.mxu0 0.0
    %178 = vmatpush1.msra.mxu0 0.0
    %179 = vmatprep.subr.mxu0 0.0
    %180 = vmatpush1.msra.mxu0 0.0
    %181 = vmatprep.subr.mxu0 0.0
    %182 = vmatpush1.msra.mxu0 0.0
    %183 = vmatprep.subr.mxu0 0.0
    %184 = vmatpush1.msra.mxu0 0.0
    %185 = vmatprep.subr.mxu0 0.0
    %186 = vmatpush1.msra.mxu0 0.0
    %187 = vmatprep.subr.mxu0 0.0
    %188 = vmatpush1.msra.mxu0 0.0
    %189 = vmatprep.subr.mxu0 0.0
    %190 = vmatpush1.msra.mxu0 0.0
    %191 = vmatprep.subr.mxu0 0.0
    %192 = vmatpush1.msra.mxu0 %v155
    %193 = vmatprep.subr.mxu0 0.0
    %194 = vmatpush1.msra.mxu0 %v154
    %195 = vmatprep.subr.mxu0 0.0
    %196 = vmatpush1.msra.mxu0 %v153
    %197 = vmatprep.subr.mxu0 0.0
    %198 = vmatpush1.msra.mxu0 %v152
    %199 = vmatprep.subr.mxu0 0.0
    %200 = vmatpush2.msra.mxu0 0.0
    %201 = vmatprep.subr.mxu0 0.0
    %202 = vmatpush2.msra.mxu0 0.0
    %203 = vmatprep.subr.mxu0 0.0
    %204 = vmatpush2.msra.mxu0 0.0
    %205 = vmatprep.subr.mxu0 0.0
    %206 = vmatpush2.msra.mxu0 0.0
    %207 = vmatprep.subr.mxu0 0.0
    %208 = vmatpush2.msra.mxu0 0.0
    %209 = vmatprep.subr.mxu0 0.0
    %210 = vmatpush2.msra.mxu0 0.0
    %211 = vmatprep.subr.mxu0 0.0
    %212 = vmatpush2.msra.mxu0 0.0
    %213 = vmatprep.subr.mxu0 0.0
    %214 = vmatpush2.msra.mxu0 0.0
    %215 = vmatprep.subr.mxu0 0.0
    %216 = vmatpush2.msra.mxu0 0.0
    %217 = vmatprep.subr.mxu0 0.0
    %218 = vmatpush2.msra.mxu0 0.0
    %219 = vmatprep.subr.mxu0 0.0
    %220 = vmatpush2.msra.mxu0 0.0
    %221 = vmatprep.subr.mxu0 0.0
    %222 = vmatpush2.msra.mxu0 0.0
    %223 = vmatprep.subr.mxu0 0.0
    %224 = vmatpush2.msra.mxu0 0.0
    %225 = vmatprep.subr.mxu0 0.0
    %226 = vmatpush2.msra.mxu0 0.0
    %227 = vmatprep.subr.mxu0 0.0
    %228 = vmatpush2.msra.mxu0 0.0
    %229 = vmatprep.subr.mxu0 0.0
    %230 = vmatpush2.msra.mxu0 0.0
    %231 = vmatprep.mubr.f32.mxu0 0.0
    %232 = vmatmul.mubr.f32.gmra.mxu0 %v165
    %v233 = vpop.f32.mrf.mxu0
    %v234 = vadd.f32 %v161, %v233
    %v235 = vpop.f32.mrf.mxu0
    %236 = vdwg.mxu0
    %v237 = vmax.f32 %v234, 0.0
    %s238 = scalar_lea.vmem [#allocation7], 32
    %v239 = vld [vmem:[%s238] sm:$0xff]
    %v240 = vld [vmem:[%s238 + $0x8] sm:$0xff]
    %v241 = vld [vmem:[%s238 + $0x10] sm:$0xff]
    %v242 = vld [vmem:[%s238 + $0x18] sm:$0xff]
    %s243 = scalar_lea.vmem %s4, 1
    %v244 = vld [vmem:[%s243] sm:$0x1]
    %v246 = vlaneseq
    %v247 = vshrl.u32 %v246, 7
    %v248 = vsub.s32 0, %v247
    %v249 = vrot.slane %v244, %v248
    %v252 = vsel %vm163, %v237, 0
    %254 = vmatprep.subr.mxu0 0.0
    %255 = vmatpush1.msra.mxu0 0.0
    %256 = vmatprep.subr.mxu0 0.0
    %257 = vmatpush1.msra.mxu0 0.0
    %258 = vmatprep.subr.mxu0 0.0
    %259 = vmatpush1.msra.mxu0 0.0
    %260 = vmatprep.subr.mxu0 0.0
    %261 = vmatpush1.msra.mxu0 0.0
    %262 = vmatprep.subr.mxu0 0.0
    %263 = vmatpush1.msra.mxu0 0.0
    %264 = vmatprep.subr.mxu0 0.0
    %265 = vmatpush1.msra.mxu0 0.0
    %266 = vmatprep.subr.mxu0 0.0
    %267 = vmatpush1.msra.mxu0 0.0
    %268 = vmatprep.subr.mxu0 0.0
    %269 = vmatpush1.msra.mxu0 0.0
    %270 = vmatprep.subr.mxu0 0.0
    %271 = vmatpush1.msra.mxu0 0.0
    %272 = vmatprep.subr.mxu0 0.0
    %273 = vmatpush1.msra.mxu0 0.0
    %274 = vmatprep.subr.mxu0 0.0
    %275 = vmatpush1.msra.mxu0 0.0
    %276 = vmatprep.subr.mxu0 0.0
    %277 = vmatpush1.msra.mxu0 0.0
    %278 = vmatprep.subr.mxu0 0.0
    %279 = vmatpush1.msra.mxu0 %v242
    %280 = vmatprep.subr.mxu0 0.0
    %281 = vmatpush1.msra.mxu0 %v241
    %282 = vmatprep.subr.mxu0 0.0
    %283 = vmatpush1.msra.mxu0 %v240
    %284 = vmatprep.subr.mxu0 0.0
    %285 = vmatpush1.msra.mxu0 %v239
    %286 = vmatprep.subr.mxu0 0.0
    %287 = vmatpush2.msra.mxu0 0.0
    %288 = vmatprep.subr.mxu0 0.0
    %289 = vmatpush2.msra.mxu0 0.0
    %290 = vmatprep.subr.mxu0 0.0
    %291 = vmatpush2.msra.mxu0 0.0
    %292 = vmatprep.subr.mxu0 0.0
    %293 = vmatpush2.msra.mxu0 0.0
    %294 = vmatprep.subr.mxu0 0.0
    %295 = vmatpush2.msra.mxu0 0.0
    %296 = vmatprep.subr.mxu0 0.0
    %297 = vmatpush2.msra.mxu0 0.0
    %298 = vmatprep.subr.mxu0 0.0
    %299 = vmatpush2.msra.mxu0 0.0
    %300 = vmatprep.subr.mxu0 0.0
    %301 = vmatpush2.msra.mxu0 0.0
    %302 = vmatprep.subr.mxu0 0.0
    %303 = vmatpush2.msra.mxu0 0.0
    %304 = vmatprep.subr.mxu0 0.0
    %305 = vmatpush2.msra.mxu0 0.0
    %306 = vmatprep.subr.mxu0 0.0
    %307 = vmatpush2.msra.mxu0 0.0
    %308 = vmatprep.subr.mxu0 0.0
    %309 = vmatpush2.msra.mxu0 0.0
    %310 = vmatprep.subr.mxu0 0.0
    %311 = vmatpush2.msra.mxu0 0.0
    %312 = vmatprep.subr.mxu0 0.0
    %313 = vmatpush2.msra.mxu0 0.0
    %314 = vmatprep.subr.mxu0 0.0
    %315 = vmatpush2.msra.mxu0 0.0
    %316 = vmatprep.subr.mxu0 0.0
    %317 = vmatpush2.msra.mxu0 0.0
    %318 = vmatprep.mubr.f32.mxu0 0.0
    %319 = vmatmul.mubr.f32.gmra.mxu0 %v252
    %v320 = vpop.f32.mrf.mxu0
    %v321 = vadd.f32 %v249, %v320
    %v322 = vpop.f32.mrf.mxu0
    %323 = vdwg.mxu0
    %v324 = vmax.f32 %v321, 0.0
    %v325 = vld [vmem:[%s5] sm:$0x1]
    %v327 = vlaneseq
    %v328 = vshrl.u32 %v327, 7
    %v329 = vsub.s32 0, %v328
    %v330 = vrot.slane %v325, %v329
    %v332 = vmul.f32 %v324, %v330
    %v333 = vsel %vm163, %v332, 0.0
    %334 = vadd.xlane.f32.xlu0 %v333
    %v335 = vpop.xlane.xlu0 %334
    %v336 = vld [vmem:[#allocation2] sm:$0x1]
    %v338 = vlaneseq
    %v339 = vshrl.u32 %v338, 7
    %v340 = vsub.s32 0, %v339
    %v341 = vrot.slane %v336, %v340
    %v343 = vadd.f32 %v335, %v341
    %vm344 = vcmask 7168
    %345 = vst.msk [vmem:[%s7] sm:$0xff] %vm344, %v343
    // Predicated region
    $region42: #{tpu_custom_call.1} parent=1 // pred_check
      _
    $region43: #{tpu_custom_call.1} parent=1 // pred_check_branch
      %347 = sbr.rel (0) target = $region45
    $region44: #{tpu_custom_call.1} parent=1 // pred_region
      _
    $region45: #{tpu_custom_call.1} parent=1 // pred_fallthru
      _
    // Predicated region
    $region46: #{tpu_custom_call.1} parent=1 // pred_check
      _
    $region47: #{tpu_custom_call.1} parent=1 // pred_check_branch
      %349 = sbr.rel (0) target = $region49
    $region48: #{tpu_custom_call.1} parent=1 // pred_region
      _
    $region49: #{tpu_custom_call.1} parent=1 // pred_fallthru
      _
    %350 = vsyncpa [#allocation4], 1
    %351 = vsyncpa [#allocation6], 1

</llo_original>
